<compile_context>
chip_gen: v7x
topology: tpu7x:2x2x1
jax: 0.10.0
libtpu: 0.0.40
codegen_flags: <defaults>
</compile_context>

<pallas_src>
import functools

import jax
import jax.numpy as jnp
from jax.experimental import pallas as pl
from jax.experimental.pallas import tpu as pltpu


def _dice_kernel(x_ref, t_ref, o_ref, inter_acc, den_acc, *,
                 smooth, rows_total, rb, num_samples, has_ragged):
    k = pl.program_id(0)
    last = pl.num_programs(0) - 1

    @pl.when(k == 0)
    def _():
        inter_acc[...] = jnp.zeros_like(inter_acc)
        den_acc[...] = jnp.zeros_like(den_acc)

    groups = rb // 8  # rb is always a multiple of 8 on the Pallas path

    def _accumulate(x, t):
        # Pure VPU work: elementwise product/sum, then vreg-granularity adds
        # (fold rb sublane-rows into groups of 8).  No cross-lane reduce here.
        prod = x * t
        ssum = x + t  # denominator only ever needs sum(x)+sum(t): keep merged
        inter_acc[...] += jnp.sum(
            prod.reshape(num_samples, groups, 8, 128), axis=1)
        den_acc[...] += jnp.sum(
            ssum.reshape(num_samples, groups, 8, 128), axis=1)

    if has_ragged:
        # Mask only the last (ragged) block; all other blocks take the plain
        # path so the steady state carries no iota/compare/select overhead.
        @pl.when(k != last)
        def _():
            _accumulate(x_ref[...].astype(jnp.float32),
                        t_ref[...].astype(jnp.float32))

        @pl.when(k == last)
        def _():
            rem = rows_total - k * rb  # valid rows remaining, 0 < rem < rb
            rows = jax.lax.broadcasted_iota(
                jnp.int32, (num_samples, rb, 128), 1)
            valid = rows < rem
            x = jnp.where(valid, x_ref[...].astype(jnp.float32), 0.0)
            t = jnp.where(valid, t_ref[...].astype(jnp.float32), 0.0)
            _accumulate(x, t)
    else:
        _accumulate(x_ref[...].astype(jnp.float32),
                    t_ref[...].astype(jnp.float32))

    @pl.when(k == last)
    def _():
        # One-time collapse: sublane fold then lane fold per sample.
        inter = jnp.sum(jnp.sum(inter_acc[...], axis=1), axis=1, keepdims=True)
        den = jnp.sum(jnp.sum(den_acc[...], axis=1), axis=1, keepdims=True)
        dice = (2.0 * inter + smooth) / (den + smooth)          # (num, 1)
        loss = 1.0 - jnp.sum(dice) / num_samples
        o_ref[...] = jnp.full(o_ref.shape, loss, dtype=o_ref.dtype)


def _dice_loss_jnp(inputs, targets, smooth=1.0):
    """Reference / small-input fallback (same math, f32 accumulation)."""
    num = targets.shape[0]
    x = inputs.reshape(num, -1).astype(jnp.float32)
    t = targets.reshape(num, -1).astype(jnp.float32)
    inter = jnp.sum(x * t, axis=1)
    dice = (2.0 * inter + smooth) / (jnp.sum(x, axis=1) + jnp.sum(t, axis=1)
                                     + smooth)
    return 1.0 - jnp.sum(dice) / num


def dice_loss(inputs, targets, smooth=1.0, *,
              target_block_bytes=2 * 1024 * 1024,
              min_pallas_bytes=1 << 20):
    """Pallas implementation of DiceLoss.forward.

    inputs, targets: arrays with a matching leading (batch) dim; any trailing
    dims.  Inputs are consumed in their native dtype.  Returns a float32
    scalar.  Tiny inputs (or rows shorter than 8*128 elements, or batches too
    large for a minimal VMEM block) take a fused jnp fallback.
    """
    num = targets.shape[0]
    x = inputs.reshape(num, -1)
    t = targets.reshape(num, -1)
    d = x.shape[1]

    itemsize = max(x.dtype.itemsize, t.dtype.itemsize)
    total_bytes = x.size * x.dtype.itemsize + t.size * t.dtype.itemsize
    r = pl.cdiv(d, 128)                       # slab rows per sample
    min_block_bytes = num * 8 * 128 * itemsize

    if (total_bytes < min_pallas_bytes or r < 8
            or min_block_bytes > 8 * 1024 * 1024):
        # XLA's fused reduction beats a Pallas launch here.
        return _dice_loss_jnp(x, t, smooth)

    # Lay each row out as (R, 128) so vregs are fully packed (8 sublanes x
    # 128 lanes) regardless of batch size.  Zero-pad the <128 column tail:
    # zeros contribute nothing to sum(x*t) or sum(x)+sum(t).
    d_pad = r * 128
    if d_pad != d:
        x = jnp.pad(x, ((0, 0), (0, d_pad - d)))
        t = jnp.pad(t, ((0, 0), (0, d_pad - d)))
    x3 = x.reshape(num, r, 128)
    t3 = t.reshape(num, r, 128)

    # Block size: ~target_block_bytes per input block (2-4 MiB is the sweet
    # spot; >= ~1 MiB already reaches ~85% of the HBM roofline), rows a
    # multiple of 8 for whole-vreg accumulation, capped for v7x's smaller VMEM.
    eff_target = min(int(target_block_bytes), 8 * 1024 * 1024)
    row_bytes = num * 128 * itemsize
    rb_max = max(8, (eff_target // row_bytes) // 8 * 8)
    rb = min(rb_max, (r // 8) * 8)
    n_chunks = pl.cdiv(r, rb)
    has_ragged = (r % rb) != 0

    # Pipelined footprint: 2 inputs x 2 buffers x block + accumulators.
    block_bytes = num * rb * 128 * itemsize
    vmem_est = 4 * block_bytes + 2 * num * 8 * 128 * 4 + (1 << 20)
    vmem_limit = int(min(48 * 1024 * 1024,
                         max(16 * 1024 * 1024, 2 * vmem_est)))

    kernel = functools.partial(
        _dice_kernel,
        smooth=float(smooth),
        rows_total=r,
        rb=rb,
        num_samples=num,
        has_ragged=has_ragged,
    )

    out = pl.pallas_call(
        kernel,
        out_shape=jax.ShapeDtypeStruct((1, 1), jnp.float32),
        grid_spec=pltpu.PrefetchScalarGridSpec(
            num_scalar_prefetch=0,
            grid=(n_chunks,),
            in_specs=[
                pl.BlockSpec((num, rb, 128), lambda k: (0, k, 0)),
                pl.BlockSpec((num, rb, 128), lambda k: (0, k, 0)),
            ],
            out_specs=pl.BlockSpec((1, 1), lambda k: (0, 0)),
            scratch_shapes=[
                pltpu.VMEM((num, 8, 128), jnp.float32),  # sum(x*t) partials
                pltpu.VMEM((num, 8, 128), jnp.float32),  # sum(x)+sum(t)
            ],
        ),
        compiler_params=pltpu.CompilerParams(
            dimension_semantics=("arbitrary",),
            vmem_limit_bytes=vmem_limit,
        ),
    )(x3, t3)
    return out[0, 0]


if __name__ == "__main__":
    key = jax.random.PRNGKey(0)
    k1, k2, k3, k4, k5, k6 = jax.random.split(key, 6)

    # Case 1: NCHW segmentation-like shape, D = 4*16*16 = 1024 (128-aligned).
    # min_pallas_bytes=0 forces the Pallas path even at this tiny size.
    x1 = jax.nn.sigmoid(jax.random.normal(k1, (2, 4, 16, 16), jnp.float32))
    t1 = (jax.random.uniform(k2, (2, 4, 16, 16)) > 0.5).astype(jnp.float32)
    got1 = jax.block_until_ready(dice_loss(x1, t1, smooth=1.0,
                                           min_pallas_bytes=0))
    ref1 = jax.block_until_ready(_dice_loss_jnp(x1, t1, smooth=1.0))
    assert jnp.allclose(got1, ref1, rtol=1e-4, atol=1e-5), (got1, ref1)

    # Same inputs via the default small-size fallback path.
    got1b = jax.block_until_ready(dice_loss(x1, t1, smooth=1.0))
    assert jnp.allclose(got1b, ref1, rtol=1e-4, atol=1e-5), (got1b, ref1)

    # Case 2: bf16 inputs, D = 3*20*20 = 1200 (not 128-aligned) -> wrapper
    # zero-pad, multi-chunk grid and ragged-row masking on the last block.
    x2 = jax.nn.sigmoid(
        jax.random.normal(k3, (2, 3, 20, 20), jnp.float32)).astype(jnp.bfloat16)
    t2 = (jax.random.uniform(k4, (2, 3, 20, 20)) > 0.5).astype(jnp.float32)
    got2 = jax.block_until_ready(
        dice_loss(x2, t2, smooth=1.0, target_block_bytes=4096,
                  min_pallas_bytes=0))
    ref2 = jax.block_until_ready(_dice_loss_jnp(x2, t2, smooth=1.0))
    assert jnp.allclose(got2, ref2, rtol=1e-4, atol=1e-5), (got2, ref2)

    # Case 3: multi-chunk f32 accumulation without masking (D = 32768).
    x3 = jax.nn.sigmoid(jax.random.normal(k5, (2, 8, 64, 64), jnp.float32))
    t3 = (jax.random.uniform(k6, (2, 8, 64, 64)) > 0.5).astype(jnp.float32)
    got3 = jax.block_until_ready(
        dice_loss(x3, t3, smooth=1.0, target_block_bytes=64 * 1024,
                  min_pallas_bytes=0))
    ref3 = jax.block_until_ready(_dice_loss_jnp(x3, t3, smooth=1.0))
    assert jnp.allclose(got3, ref3, rtol=1e-4, atol=1e-5), (got3, ref3)

    print("KERNEL_OK")
</pallas_src>

<mosaic_0001>
module attributes {stable_mosaic.version = 11 : i64} {
  func.func @_dice_kernel(%arg0: i32, %arg1: memref<2x8x128xf32, #tpu.memory_space<vmem>>, %arg2: memref<2x8x128xf32, #tpu.memory_space<vmem>>, %arg3: memref<1x1xf32, #tpu.memory_space<vmem>>, %arg4: memref<2x8x128xf32, #tpu.memory_space<vmem>>, %arg5: memref<2x8x128xf32, #tpu.memory_space<vmem>>) attributes {dimension_semantics = [#tpu.dimension_semantics<arbitrary>], iteration_bounds = array<i64: 1>, scalar_prefetch = 0 : i64, scratch_operands = 2 : i64, tpu.core_type = #tpu.core_type<tc>, window_params = [{transform_indices = @transform_0, window_bounds = array<i64: 2, 8, 128>}, {transform_indices = @transform_1, window_bounds = array<i64: 2, 8, 128>}, {pipeline_mode = #tpu.pipeline_mode<synchronous>, transform_indices = @transform_2, window_bounds = array<i64: 1, 1>}]} {
    %c0_i32 = arith.constant 0 : i32
    %0 = arith.cmpi eq, %arg0, %c0_i32 : i32
    %1 = arith.extui %0 : i1 to i32
    %c0_i32_0 = arith.constant 0 : i32
    %2 = arith.cmpi ne, %1, %c0_i32_0 : i32
    scf.if %2 {
      %cst_21 = arith.constant 0.000000e+00 : f32
      %20 = vector.broadcast %cst_21 : f32 to vector<2x8x128xf32>
      %c0_22 = arith.constant 0 : index
      %c0_23 = arith.constant 0 : index
      %c0_24 = arith.constant 0 : index
      %21 = vector.load %arg4[%c0_22, %c0_23, %c0_24] : memref<2x8x128xf32, #tpu.memory_space<vmem>>, vector<2x8x128xf32>
      tpu.vector_store %arg4[%c0_22, %c0_23, %c0_24], %20 {strides = array<i32>} : memref<2x8x128xf32, #tpu.memory_space<vmem>>, vector<2x8x128xf32>,
      %cst_25 = arith.constant 0.000000e+00 : f32
      %22 = vector.broadcast %cst_25 : f32 to vector<2x8x128xf32>
      %c0_26 = arith.constant 0 : index
      %c0_27 = arith.constant 0 : index
      %c0_28 = arith.constant 0 : index
      %23 = vector.load %arg5[%c0_26, %c0_27, %c0_28] : memref<2x8x128xf32, #tpu.memory_space<vmem>>, vector<2x8x128xf32>
      tpu.vector_store %arg5[%c0_26, %c0_27, %c0_28], %22 {strides = array<i32>} : memref<2x8x128xf32, #tpu.memory_space<vmem>>, vector<2x8x128xf32>,
    } else {
    }
    %c0 = arith.constant 0 : index
    %c0_1 = arith.constant 0 : index
    %c0_2 = arith.constant 0 : index
    %3 = vector.load %arg1[%c0, %c0_1, %c0_2] : memref<2x8x128xf32, #tpu.memory_space<vmem>>, vector<2x8x128xf32>
    %c0_3 = arith.constant 0 : index
    %c0_4 = arith.constant 0 : index
    %c0_5 = arith.constant 0 : index
    %4 = vector.load %arg2[%c0_3, %c0_4, %c0_5] : memref<2x8x128xf32, #tpu.memory_space<vmem>>, vector<2x8x128xf32>
    %5 = arith.mulf %3, %4 : vector<2x8x128xf32>
    %6 = arith.addf %3, %4 : vector<2x8x128xf32>
    %c0_6 = arith.constant 0 : index
    %c0_7 = arith.constant 0 : index
    %c0_8 = arith.constant 0 : index
    %7 = vector.load %arg4[%c0_6, %c0_7, %c0_8] : memref<2x8x128xf32, #tpu.memory_space<vmem>>, vector<2x8x128xf32>
    %8 = vector.shape_cast %5 : vector<2x8x128xf32> to vector<2x1x8x128xf32>
    %cst = arith.constant dense<0.000000e+00> : vector<2x8x128xf32>
    %9 = vector.multi_reduction <add>, %8, %cst [1] : vector<2x1x8x128xf32> to vector<2x8x128xf32>
    %10 = arith.addf %7, %9 : vector<2x8x128xf32>
    %c0_9 = arith.constant 0 : index
    %c0_10 = arith.constant 0 : index
    %c0_11 = arith.constant 0 : index
    %11 = vector.load %arg4[%c0_9, %c0_10, %c0_11] : memref<2x8x128xf32, #tpu.memory_space<vmem>>, vector<2x8x128xf32>
    tpu.vector_store %arg4[%c0_9, %c0_10, %c0_11], %10 {strides = array<i32>} : memref<2x8x128xf32, #tpu.memory_space<vmem>>, vector<2x8x128xf32>,
    %c0_12 = arith.constant 0 : index
    %c0_13 = arith.constant 0 : index
    %c0_14 = arith.constant 0 : index
    %12 = vector.load %arg5[%c0_12, %c0_13, %c0_14] : memref<2x8x128xf32, #tpu.memory_space<vmem>>, vector<2x8x128xf32>
    %13 = vector.shape_cast %6 : vector<2x8x128xf32> to vector<2x1x8x128xf32>
    %cst_15 = arith.constant dense<0.000000e+00> : vector<2x8x128xf32>
    %14 = vector.multi_reduction <add>, %13, %cst_15 [1] : vector<2x1x8x128xf32> to vector<2x8x128xf32>
    %15 = arith.addf %12, %14 : vector<2x8x128xf32>
    %c0_16 = arith.constant 0 : index
    %c0_17 = arith.constant 0 : index
    %c0_18 = arith.constant 0 : index
    %16 = vector.load %arg5[%c0_16, %c0_17, %c0_18] : memref<2x8x128xf32, #tpu.memory_space<vmem>>, vector<2x8x128xf32>
    tpu.vector_store %arg5[%c0_16, %c0_17, %c0_18], %15 {strides = array<i32>} : memref<2x8x128xf32, #tpu.memory_space<vmem>>, vector<2x8x128xf32>,
    %c0_i32_19 = arith.constant 0 : i32
    %17 = arith.cmpi eq, %arg0, %c0_i32_19 : i32
    %18 = arith.extui %17 : i1 to i32
    %c0_i32_20 = arith.constant 0 : i32
    %19 = arith.cmpi ne, %18, %c0_i32_20 : i32
    scf.if %19 {
      %c0_21 = arith.constant 0 : index
      %c0_22 = arith.constant 0 : index
      %c0_23 = arith.constant 0 : index
      %20 = vector.load %arg4[%c0_21, %c0_22, %c0_23] : memref<2x8x128xf32, #tpu.memory_space<vmem>>, vector<2x8x128xf32>
      %cst_24 = arith.constant dense<0.000000e+00> : vector<2x128xf32>
      %21 = vector.multi_reduction <add>, %20, %cst_24 [1] : vector<2x8x128xf32> to vector<2x128xf32>
      %cst_25 = arith.constant dense<0.000000e+00> : vector<2xf32>
      %22 = vector.multi_reduction <add>, %21, %cst_25 [1] : vector<2x128xf32> to vector<2xf32>
      %23 = vector.shape_cast %22 : vector<2xf32> to vector<2x1xf32>
      %c0_26 = arith.constant 0 : index
      %c0_27 = arith.constant 0 : index
      %c0_28 = arith.constant 0 : index
      %24 = vector.load %arg5[%c0_26, %c0_27, %c0_28] : memref<2x8x128xf32, #tpu.memory_space<vmem>>, vector<2x8x128xf32>
      %cst_29 = arith.constant dense<0.000000e+00> : vector<2x128xf32>
      %25 = vector.multi_reduction <add>, %24, %cst_29 [1] : vector<2x8x128xf32> to vector<2x128xf32>
      %cst_30 = arith.constant dense<0.000000e+00> : vector<2xf32>
      %26 = vector.multi_reduction <add>, %25, %cst_30 [1] : vector<2x128xf32> to vector<2xf32>
      %27 = vector.shape_cast %26 : vector<2xf32> to vector<2x1xf32>
      %cst_31 = arith.constant 2.000000e+00 : f32
      %28 = vector.broadcast %cst_31 : f32 to vector<2x1xf32>
      %29 = arith.mulf %28, %23 : vector<2x1xf32>
      %cst_32 = arith.constant 1.000000e+00 : f32
      %30 = vector.broadcast %cst_32 : f32 to vector<2x1xf32>
      %31 = arith.addf %29, %30 : vector<2x1xf32>
      %cst_33 = arith.constant 1.000000e+00 : f32
      %32 = vector.broadcast %cst_33 : f32 to vector<2x1xf32>
      %33 = arith.addf %27, %32 : vector<2x1xf32>
      %34 = arith.divf %31, %33 : vector<2x1xf32>
      %35 = vector.shape_cast %34 : vector<2x1xf32> to vector<1x2x1xf32>
      %cst_34 = arith.constant dense<0.000000e+00> : vector<1xf32>
      %36 = vector.multi_reduction <add>, %35, %cst_34 [1, 2] : vector<1x2x1xf32> to vector<1xf32>
      %37 = vector.shape_cast %36 : vector<1xf32> to vector<1x1x1xf32>
      %38 = vector.extract %37[0, 0, 0] : f32 from vector<1x1x1xf32>
      %cst_35 = arith.constant 2.000000e+00 : f32
      %39 = arith.divf %38, %cst_35 : f32
      %cst_36 = arith.constant 1.000000e+00 : f32
      %40 = arith.subf %cst_36, %39 : f32
      %41 = vector.broadcast %40 : f32 to vector<1x1xf32>
      %c0_37 = arith.constant 0 : index
      %c0_38 = arith.constant 0 : index
      %42 = vector.load %arg3[%c0_37, %c0_38] : memref<1x1xf32, #tpu.memory_space<vmem>>, vector<1x1xf32>
      tpu.vector_store %arg3[%c0_37, %c0_38], %41 {strides = array<i32>} : memref<1x1xf32, #tpu.memory_space<vmem>>, vector<1x1xf32>,
    } else {
    }
    return
  }
  func.func @transform_0(%arg0: i32) -> (i32, i32, i32) {
    %c0_i32 = arith.constant 0 : i32
    %c0_i32_0 = arith.constant 0 : i32
    %c0_i32_1 = arith.constant 0 : i32
    return %c0_i32, %arg0, %c0_i32_0 : i32, i32, i32
  }
  func.func @transform_1(%arg0: i32) -> (i32, i32, i32) {
    %c0_i32 = arith.constant 0 : i32
    %c0_i32_0 = arith.constant 0 : i32
    %c0_i32_1 = arith.constant 0 : i32
    return %c0_i32, %arg0, %c0_i32_0 : i32, i32, i32
  }
  func.func @transform_2(%arg0: i32) -> (i32, i32) {
    %c0_i32 = arith.constant 0 : i32
    %c0_i32_0 = arith.constant 0 : i32
    %c0_i32_1 = arith.constant 0 : i32
    return %c0_i32, %c0_i32_0 : i32, i32
  }
}

</mosaic_0001>

<llo_original>
// kernel: tpu_custom_call.1
$region0: #{tpu_custom_call.1}
  #allocation0 [shape = 'u32[]', space=smem, size = 0x4, offset = 0x4, fixed_abs, tag = 'smem constant byte address 0x4 - core index']
  #allocation1 [shape = 'u32[144,128]{1,0:T(1,128)}', space=vmem, size = 0x12000, scoped, tag = 'internal scratch']
  #allocation2 [shape = 'f32[2,8,128]{2,1,0:T(8,128)}', space=vmem, size = 0x2000, scoped, tag = 'scratch operand']
  #allocation3 [shape = 'f32[2,8,128]{2,1,0:T(8,128)}', space=vmem, size = 0x2000, scoped, tag = 'scratch operand']
  %s0 = inlined_call_operand.hbm [shape: f32[2,8,128], index: 0, kind: input, shape index: {}]
  %s1 = inlined_call_operand.hbm [shape: f32[2,8,128], index: 1, kind: input, shape index: {}]
  %s2 = inlined_call_operand.hbm [shape: f32[1,1], index: 2, kind: output, shape index: {}]
  %s3 = sld [smem:[#allocation0]]
  $region34: #{tpu_custom_call.1} parent=0
    _
  %s5 = ssub.s32 1, %s3
  %s6 = scalar_select 0, %s5, %s3
  $region1: #{tpu_custom_call.1} parent=0
    #allocation4 [shape = 'u8[8192]{0}', space=vmem, size = 0x2000, scoped, tag = 'input window, operand 0, single buffered']
    #allocation5 [shape = 's32[1]{0}', space=sflag, size = 0x4, scoped, tag = 'scoped memory for tpu_custom_call.1']
    #allocation6 [shape = 's32[1]{0}', space=sflag, size = 0x4, scoped, tag = 'scoped memory for tpu_custom_call.1']
    #allocation7 [shape = 'u8[8192]{0}', space=vmem, size = 0x2000, scoped, tag = 'input window, operand 1, single buffered']
    #allocation8 [shape = 's32[1]{0}', space=sflag, size = 0x4, scoped, tag = 'scoped memory for tpu_custom_call.1']
    #allocation9 [shape = 'u8[512]{0}', space=vmem, size = 0x400, scoped, tag = 'output window, operand 0, single buffered']
    %7 = vsyncpa [#allocation5], 0
    %8 = vsyncpa [#allocation8], 0
    %9 = vsyncpa [#allocation6], 0
    // Predicated region
    $region2: #{tpu_custom_call.1} parent=1 // pred_check
      _
    $region3: #{tpu_custom_call.1} parent=1 // pred_check_branch
      %11 = sbr.rel (0) target = $region5
    $region4: #{tpu_custom_call.1} parent=1 // pred_region
      %s13 = ssub.s32 256, 256
      %14 = vsyncadd [#allocation5], %s13
      %s15 = sshll.u32 [#allocation4], 4
      %s16 = int_to_ptr.vmem [resolvable:$true] %s15
      %21 = dma.hbm_to_vmem [thread:$0]  %s0, 256, %s16, [#allocation5], 128, 128, 8
    $region5: #{tpu_custom_call.1} parent=1 // pred_fallthru
      _
    // Predicated region
    $region6: #{tpu_custom_call.1} parent=1 // pred_check
      _
    $region7: #{tpu_custom_call.1} parent=1 // pred_check_branch
      %23 = sbr.rel (0) target = $region9
    $region8: #{tpu_custom_call.1} parent=1 // pred_region
      %s25 = ssub.s32 256, 256
      %26 = vsyncadd [#allocation8], %s25
      %s27 = sshll.u32 [#allocation7], 4
      %s28 = int_to_ptr.vmem [resolvable:$true] %s27
      %33 = dma.hbm_to_vmem [thread:$0]  %s1, 256, %s28, [#allocation8], 128, 128, 8
    $region9: #{tpu_custom_call.1} parent=1 // pred_fallthru
      _
    // Predicated region
    $region10: #{tpu_custom_call.1} parent=1 // pred_check
      _
    $region11: #{tpu_custom_call.1} parent=1 // pred_check_branch
      %35 = sbr.rel (0) target = $region13
    $region12: #{tpu_custom_call.1} parent=1 // pred_region
      %36 = dma.done [#allocation5], 256
    $region13: #{tpu_custom_call.1} parent=1 // pred_fallthru
      _
    // Predicated region
    $region14: #{tpu_custom_call.1} parent=1 // pred_check
      _
    $region15: #{tpu_custom_call.1} parent=1 // pred_check_branch
      %38 = sbr.rel (0) target = $region17
    $region16: #{tpu_custom_call.1} parent=1 // pred_region
      %39 = dma.done [#allocation8], 256
    $region17: #{tpu_custom_call.1} parent=1 // pred_fallthru
      _
    %p40 = scmp.eq.s32.totalorder 0, 0
    // Predicated region
    $region18: #{tpu_custom_call.1} parent=1 // pred_check
      %p41 = pneg %p40
    $region19: #{tpu_custom_call.1} parent=1 // pred_check_branch
      %43 = sbr.rel (%p41) target = $region21
    $region20: #{tpu_custom_call.1} parent=1 // pred_region
      %44 = vst [vmem:[#allocation2] sm:$0xff] 0.0
      %45 = vst [vmem:[#allocation2 + $0x8] sm:$0xff] 0.0
      %46 = vst [vmem:[#allocation3] sm:$0xff] 0.0
      %47 = vst [vmem:[#allocation3 + $0x8] sm:$0xff] 0.0
    $region21: #{tpu_custom_call.1} parent=1 // pred_fallthru
      _
    %v48 = vld [vmem:[#allocation4] sm:$0xff]
    %v49 = vld [vmem:[#allocation4 + $0x8] sm:$0xff]
    %v50 = vld [vmem:[#allocation7] sm:$0xff]
    %v51 = vld [vmem:[#allocation7 + $0x8] sm:$0xff]
    %v52 = vmul.f32 %v48, %v50
    %v53 = vmul.f32 %v49, %v51
    %v54 = vadd.f32 %v48, %v50
    %v55 = vadd.f32 %v49, %v51
    %v56 = vld [vmem:[#allocation2] sm:$0xff]
    %v57 = vld [vmem:[#allocation2 + $0x8] sm:$0xff]
    %v58 = vadd.f32 %v52, 0.0
    %v59 = vadd.f32 %v53, 0.0
    %v60 = vadd.f32 %v56, %v58
    %v61 = vadd.f32 %v57, %v59
    %62 = vst [vmem:[#allocation2] sm:$0xff] %v60
    %63 = vst [vmem:[#allocation2 + $0x8] sm:$0xff] %v61
    %v64 = vld [vmem:[#allocation3] sm:$0xff]
    %v65 = vld [vmem:[#allocation3 + $0x8] sm:$0xff]
    %v66 = vadd.f32 %v54, 0.0
    %v67 = vadd.f32 %v55, 0.0
    %v68 = vadd.f32 %v64, %v66
    %v69 = vadd.f32 %v65, %v67
    %70 = vst [vmem:[#allocation3] sm:$0xff] %v68
    %71 = vst [vmem:[#allocation3 + $0x8] sm:$0xff] %v69
    // Predicated region
    $region22: #{tpu_custom_call.1} parent=1 // pred_check
      %p72 = pneg %p40
    $region23: #{tpu_custom_call.1} parent=1 // pred_check_branch
      %74 = sbr.rel (%p72) target = $region25
    $region24: #{tpu_custom_call.1} parent=1 // pred_region
      %v75 = vld [vmem:[#allocation2] sm:$0xff]
      %v76 = vld [vmem:[#allocation2 + $0x8] sm:$0xff]
      %v77 = vrot.slane %v75, 4
      %v78 = vadd.f32 %v75, %v77
      %v79 = vrot.slane %v78, 2
      %v80 = vadd.f32 %v78, %v79
      %v81 = vrot.slane %v80, 1
      %v82 = vadd.f32 %v80, %v81
      %v83 = vrot.slane %v76, 4
      %v84 = vadd.f32 %v76, %v83
      %v85 = vrot.slane %v84, 2
      %v86 = vadd.f32 %v84, %v85
      %v87 = vrot.slane %v86, 1
      %v88 = vadd.f32 %v86, %v87
      %vm91 = vcmask 1041409
      %v92 = vsel %vm91, %v88, %v82
      %vm94 = vcmask 1041408
      %v95 = vsel %vm94, %v92, 0.0
      %96 = vadd.xlane.f32.xlu0 %v95
      %v97 = vpop.xlane.xlu0 %96
      %v98 = vld [vmem:[#allocation3] sm:$0xff]
      %v99 = vld [vmem:[#allocation3 + $0x8] sm:$0xff]
      %v100 = vrot.slane %v98, 4
      %v101 = vadd.f32 %v98, %v100
      %v102 = vrot.slane %v101, 2
      %v103 = vadd.f32 %v101, %v102
      %v104 = vrot.slane %v103, 1
      %v105 = vadd.f32 %v103, %v104
      %v106 = vrot.slane %v99, 4
      %v107 = vadd.f32 %v99, %v106
      %v108 = vrot.slane %v107, 2
      %v109 = vadd.f32 %v107, %v108
      %v110 = vrot.slane %v109, 1
      %v111 = vadd.f32 %v109, %v110
      %v114 = vsel %vm91, %v111, %v105
      %v116 = vsel %vm94, %v114, 0.0
      %117 = vadd.xlane.f32.xlu0 %v116
      %v118 = vpop.xlane.xlu0 %117
      %v119 = vmul.f32 %v97, 2.0
      %v120 = vadd.f32 %v119, 1.0
      %v121 = vadd.f32 %v118, 1.0
      %v122 = vrcp.pop %v121
      %v123 = vmul.f32 %v120, %v122
      %vm124 = vcmask 1024
      %v125 = vsel %vm124, %v123, 0.0
      %126 = vadd.xlane.f32.xlu0 %v125
      %v127 = vpop.xlane.xlu0 %126
      %v128 = vrot.slane %v127, 4
      %v129 = vadd.f32 %v127, %v128
      %v130 = vrot.slane %v129, 2
      %v131 = vadd.f32 %v129, %v130
      %v132 = vrot.slane %v131, 1
      %v133 = vadd.f32 %v131, %v132
      %s134 = vtos %v133
      %v135 = vrcp.pop 2.0
      %s136 = vtos %v135
      %s137 = smul.f32 %s134, %s136
      %s138 = ssub.f32 1.0, %s137
      %v139 = vstv %s138
      %vm140 = vcmask 0
      %141 = vst.msk [vmem:[#allocation9] sm:$0x1] %vm140, %v139
    $region25: #{tpu_custom_call.1} parent=1 // pred_fallthru
      _
    // Predicated region
    $region26: #{tpu_custom_call.1} parent=1 // pred_check
      _
    $region27: #{tpu_custom_call.1} parent=1 // pred_check_branch
      %143 = sbr.rel (0) target = $region29
    $region28: #{tpu_custom_call.1} parent=1 // pred_region
      %s145 = ssub.s32 16, 16
      %146 = vsyncadd [#allocation6], %s145
      %s148 = sshll.u32 [#allocation9], 4
      %s149 = int_to_ptr.vmem [resolvable:$true] %s148
      %151 = dma.vmem_to_hbm [thread:$0]  %s149, 16, %s2, [#allocation6]
    $region29: #{tpu_custom_call.1} parent=1 // pred_fallthru
      _
    // Predicated region
    $region30: #{tpu_custom_call.1} parent=1 // pred_check
      _
    $region31: #{tpu_custom_call.1} parent=1 // pred_check_branch
      %153 = sbr.rel (0) target = $region33
    $region32: #{tpu_custom_call.1} parent=1 // pred_region
      %154 = dma.done [#allocation6], 16
    $region33: #{tpu_custom_call.1} parent=1 // pred_fallthru
      _
    %155 = vsyncpa [#allocation5], 1
    %156 = vsyncpa [#allocation8], 1
    %157 = vsyncpa [#allocation6], 1

</llo_original>
